<compile_context>
chip_gen: v7x
topology: tpu7x:2x2x1
jax: 0.10.0
libtpu: 0.0.40
codegen_flags: <defaults>
</compile_context>

<pallas_src>
import functools

import jax
import jax.numpy as jnp
from jax.experimental import pallas as pl
from jax.experimental.pallas import tpu as pltpu

NUM_CLASSES = 8
LANE = 128


def _round_up(x, m):
    return ((x + m - 1) // m) * m


# ---------------------------------------------------------------------------
# Static model parameters: pad/cast once, outside the per-call path.
# ---------------------------------------------------------------------------
def prepare_model_params(w, b):
    """Pad the class dim to 128 lanes and cast W to bf16, exactly once."""
    D, N = w.shape
    n_pad = _round_up(N, LANE)
    w_p = jnp.zeros((D, n_pad), jnp.bfloat16).at[:, :N].set(w.astype(jnp.bfloat16))
    b_p = jnp.zeros((1, n_pad), jnp.float32).at[0, :N].set(b.astype(jnp.float32))
    return w_p, b_p


# ---------------------------------------------------------------------------
# Plain forward kernel: single-shot collapsed-K matmul, bias fused in epilogue.
# ---------------------------------------------------------------------------
def _logits_kernel(x_ref, w_ref, b_ref, o_ref):
    # x is f32 in VMEM; cast to bf16 on the VPU, MXU dot with f32 accumulation.
    acc = jnp.dot(x_ref[...].astype(jnp.bfloat16), w_ref[...],
                  preferred_element_type=jnp.float32)
    o_ref[...] = (acc + b_ref[...]).astype(o_ref.dtype)


@functools.partial(jax.jit, static_argnames=("num_classes",))
def synthetic_model(x, w_p, b_p, *, num_classes):
    """Synthetic wrapped classifier: returns {'logits': flatten(x) @ W + b}."""
    M = x.shape[0]
    x_flat = x.reshape(M, -1).astype(jnp.float32)
    D = x_flat.shape[1]
    n_pad = w_p.shape[1]
    assert w_p.shape[0] == D

    # K is collapsed: the whole (x tile, W, out) footprint fits VMEM at this
    # model size.  For D large enough to break that, re-add a K grid (tk>=2048)
    # with an f32 accumulator + pl.when init/finalize.
    if M <= 256:
        tm, m_pad, x_p = M, M, x_flat          # full-M block, no padding
    else:
        tm = 256                               # fills v6e/v7x 256-wide MXU
        m_pad = _round_up(M, tm)
        x_p = x_flat if m_pad == M else (
            jnp.zeros((m_pad, D), x_flat.dtype).at[:M].set(x_flat))

    grid = (m_pad // tm,)
    cost = pl.CostEstimate(
        flops=2 * m_pad * D * n_pad,
        transcendentals=0,
        bytes_accessed=m_pad * D * 4 + D * n_pad * 2 + n_pad * 4
                       + m_pad * n_pad * 4,
    )

    logits_pad = pl.pallas_call(
        _logits_kernel,
        out_shape=jax.ShapeDtypeStruct((m_pad, n_pad), jnp.float32),
        grid_spec=pltpu.PrefetchScalarGridSpec(
            num_scalar_prefetch=0,
            grid=grid,
            in_specs=[
                pl.BlockSpec((tm, D), lambda i: (i, 0)),
                pl.BlockSpec((D, n_pad), lambda i: (0, 0)),   # W resident
                pl.BlockSpec((1, n_pad), lambda i: (0, 0)),   # bias resident
            ],
            out_specs=pl.BlockSpec((tm, n_pad), lambda i: (i, 0)),
        ),
        compiler_params=pltpu.CompilerParams(
            dimension_semantics=("parallel",)),
        cost_estimate=cost,
    )(x_p, w_p, b_p)

    # The [:M, :num_classes] slice is load-bearing (strips M/lane padding).
    return {"logits": logits_pad[:M, :num_classes]}


def ig_wrapper_forward(x, w_p, b_p):
    """IGWrapper.forward: run the wrapped model and return its 'logits'."""
    return synthetic_model(x, w_p, b_p, num_classes=NUM_CLASSES)["logits"]


# ---------------------------------------------------------------------------
# Fused IG kernel: interpolation + forward, x/baseline/W read from HBM once.
# ---------------------------------------------------------------------------
def _ig_fused_kernel(x_ref, base_ref, alpha_ref, w_ref, b_ref, o_ref):
    x = x_ref[0]          # (1, D) f32, row for this batch element
    base = base_ref[0]    # (1, D) f32
    # baseline + alpha * (x - baseline), per interpolation step (VPU has slack).
    xi = base + alpha_ref[...] * (x - base)            # (spt, D) f32
    acc = jnp.dot(xi.astype(jnp.bfloat16), w_ref[...],
                  preferred_element_type=jnp.float32)  # (spt, n_pad)
    o_ref[...] = (acc + b_ref[...]).astype(o_ref.dtype)


@functools.partial(jax.jit, static_argnames=("num_classes",))
def ig_interpolated_forward(x, baseline, alphas, w_p, b_p, *, num_classes):
    """IGWrapper.forward over all IG interpolation points, with the
    interpolation fused into the kernel (no (steps*B, D) intermediate)."""
    B = x.shape[0]
    x2 = x.reshape(B, -1).astype(jnp.float32)
    base2 = baseline.reshape(B, -1).astype(jnp.float32)
    D = x2.shape[1]
    n_pad = w_p.shape[1]
    S = alphas.shape[0]

    spt = min(128, _round_up(S, 8))       # interpolation steps per tile
    s_pad = _round_up(S, spt)
    T = s_pad // spt

    x3 = x2.reshape(B, 1, D)              # free metadata reshapes
    base3 = base2.reshape(B, 1, D)
    alpha_col = jnp.zeros((s_pad, 1), jnp.float32).at[:S, 0].set(
        alphas.astype(jnp.float32))

    cost = pl.CostEstimate(
        flops=2 * B * s_pad * D * n_pad + 3 * B * s_pad * D,
        transcendentals=0,
        bytes_accessed=2 * B * D * 4 + s_pad * 4 + D * n_pad * 2
                       + B * s_pad * n_pad * 4,
    )

    out_pad = pl.pallas_call(
        _ig_fused_kernel,
        out_shape=jax.ShapeDtypeStruct((B * s_pad, n_pad), jnp.float32),
        grid_spec=pltpu.PrefetchScalarGridSpec(
            num_scalar_prefetch=0,
            grid=(B, T),
            in_specs=[
                pl.BlockSpec((1, 1, D), lambda bi, t: (bi, 0, 0)),   # x row
                pl.BlockSpec((1, 1, D), lambda bi, t: (bi, 0, 0)),   # baseline row
                pl.BlockSpec((spt, 1), lambda bi, t: (t, 0)),        # alphas
                pl.BlockSpec((D, n_pad), lambda bi, t: (0, 0)),      # W resident
                pl.BlockSpec((1, n_pad), lambda bi, t: (0, 0)),      # bias resident
            ],
            out_specs=pl.BlockSpec((spt, n_pad),
                                   lambda bi, t: (bi * T + t, 0)),
        ),
        compiler_params=pltpu.CompilerParams(
            dimension_semantics=("parallel", "parallel")),
        cost_estimate=cost,
    )(x3, base3, alpha_col, w_p, b_p)

    # (B*s_pad, n_pad) -> (S, B, num_classes), step-major to match the usual
    # torch-style stacked interpolation batch.
    out = out_pad.reshape(B, s_pad, n_pad)[:, :S, :num_classes]
    return jnp.transpose(out, (1, 0, 2))


# ---------------------------------------------------------------------------
# Demo / correctness checks.
# ---------------------------------------------------------------------------
if __name__ == "__main__":
    # Small shapes consistent with an image classifier wrapped by IGWrapper.
    B, C, H, W = 2, 4, 16, 16
    D = C * H * W   # 1024

    key = jax.random.PRNGKey(0)
    kx, kw, kb = jax.random.split(key, 3)
    x = jax.random.normal(kx, (B, C, H, W), dtype=jnp.float32)
    w = jax.random.normal(kw, (D, NUM_CLASSES), dtype=jnp.float32) * (D ** -0.5)
    b = jax.random.normal(kb, (NUM_CLASSES,), dtype=jnp.float32) * 0.01

    # Static weights padded / cast exactly once (hoisted out of the call path).
    w_p, b_p = jax.block_until_ready(prepare_model_params(w, b))

    # 1) Plain IGWrapper forward on the raw batch (M=2, full-block, no padding).
    logits = jax.block_until_ready(ig_wrapper_forward(x, w_p, b_p))
    ref = x.reshape(B, D) @ w + b
    assert logits.shape == (B, NUM_CLASSES)
    assert jnp.allclose(logits, ref, atol=3e-2, rtol=3e-2)   # bf16 MXU inputs

    # 2) Integrated-gradients usage: interpolation fused into the kernel,
    #    x / baseline / W DMA'd once, (B, step_tiles) parallel grid.
    num_steps = 64
    baseline = jnp.zeros_like(x)
    alphas = jnp.arange(1, num_steps + 1, dtype=jnp.float32) / num_steps

    logits_ig = jax.block_until_ready(
        ig_interpolated_forward(x, baseline, alphas, w_p, b_p,
                                num_classes=NUM_CLASSES))
    x_ig = baseline[None] + alphas[:, None, None, None, None] * (x - baseline)[None]
    ref_ig = x_ig.reshape(num_steps * B, D) @ w + b
    assert logits_ig.shape == (num_steps, B, NUM_CLASSES)
    assert jnp.allclose(logits_ig.reshape(num_steps * B, NUM_CLASSES), ref_ig,
                        atol=3e-2, rtol=3e-2)

    # 3) Consistency: materialized-interpolation batch through the plain
    #    collapsed-K kernel (M=128 single-shot path).
    logits_mat = jax.block_until_ready(
        ig_wrapper_forward(x_ig.reshape(num_steps * B, C, H, W), w_p, b_p))
    assert logits_mat.shape == (num_steps * B, NUM_CLASSES)
    assert jnp.allclose(logits_mat, ref_ig, atol=3e-2, rtol=3e-2)

    print("KERNEL_OK")
</pallas_src>

<mosaic_0001>
module attributes {stable_mosaic.version = 11 : i64} {
  func.func @_logits_kernel(%arg0: i32, %arg1: memref<2x1024xf32, #tpu.memory_space<vmem>>, %arg2: memref<1024x128xbf16, #tpu.memory_space<vmem>>, %arg3: memref<1x128xf32, #tpu.memory_space<vmem>>, %arg4: memref<2x128xf32, #tpu.memory_space<vmem>>) attributes {dimension_semantics = [#tpu.dimension_semantics<parallel>], iteration_bounds = array<i64: 1>, scalar_prefetch = 0 : i64, scratch_operands = 0 : i64, tpu.core_type = #tpu.core_type<tc>, window_params = [{transform_indices = @transform_0, window_bounds = array<i64: 2, 1024>}, {pipeline_mode = #tpu.pipeline_mode<synchronous>, transform_indices = @transform_1, window_bounds = array<i64: 1024, 128>}, {pipeline_mode = #tpu.pipeline_mode<synchronous>, transform_indices = @transform_2, window_bounds = array<i64: 1, 128>}, {transform_indices = @transform_3, window_bounds = array<i64: 2, 128>}]} {
    %c0 = arith.constant 0 : index
    %c0_0 = arith.constant 0 : index
    %0 = vector.load %arg1[%c0, %c0_0] : memref<2x1024xf32, #tpu.memory_space<vmem>>, vector<2x1024xf32>
    %1 = arith.truncf %0 : vector<2x1024xf32> to vector<2x1024xbf16>
    %c0_1 = arith.constant 0 : index
    %c0_2 = arith.constant 0 : index
    %2 = vector.load %arg2[%c0_1, %c0_2] : memref<1024x128xbf16, #tpu.memory_space<vmem>>, vector<1024x128xbf16>
    %cst = arith.constant dense<0.000000e+00> : vector<2x128xf32>
    %3 = tpu.matmul %1, %2, %cst {dimension_numbers = #tpu.dot_dimension_numbers<[1], [0], [0], [1], [0, 0, 1, 1], [], []>} : vector<2x1024xbf16>, vector<1024x128xbf16>, vector<2x128xf32> -> vector<2x128xf32>
    %c0_3 = arith.constant 0 : index
    %c0_4 = arith.constant 0 : index
    %4 = vector.load %arg3[%c0_3, %c0_4] : memref<1x128xf32, #tpu.memory_space<vmem>>, vector<1x128xf32>
    %5 = vector.broadcast %4 : vector<1x128xf32> to vector<2x128xf32>
    %6 = arith.addf %3, %5 : vector<2x128xf32>
    %c0_5 = arith.constant 0 : index
    %c0_6 = arith.constant 0 : index
    %7 = vector.load %arg4[%c0_5, %c0_6] : memref<2x128xf32, #tpu.memory_space<vmem>>, vector<2x128xf32>
    tpu.vector_store %arg4[%c0_5, %c0_6], %6 {strides = array<i32>} : memref<2x128xf32, #tpu.memory_space<vmem>>, vector<2x128xf32>,
    return
  }
  func.func @transform_0(%arg0: i32) -> (i32, i32) {
    %c0_i32 = arith.constant 0 : i32
    %c0_i32_0 = arith.constant 0 : i32
    return %arg0, %c0_i32 : i32, i32
  }
  func.func @transform_1(%arg0: i32) -> (i32, i32) {
    %c0_i32 = arith.constant 0 : i32
    %c0_i32_0 = arith.constant 0 : i32
    %c0_i32_1 = arith.constant 0 : i32
    return %c0_i32, %c0_i32_0 : i32, i32
  }
  func.func @transform_2(%arg0: i32) -> (i32, i32) {
    %c0_i32 = arith.constant 0 : i32
    %c0_i32_0 = arith.constant 0 : i32
    %c0_i32_1 = arith.constant 0 : i32
    return %c0_i32, %c0_i32_0 : i32, i32
  }
  func.func @transform_3(%arg0: i32) -> (i32, i32) {
    %c0_i32 = arith.constant 0 : i32
    %c0_i32_0 = arith.constant 0 : i32
    return %arg0, %c0_i32 : i32, i32
  }
}

</mosaic_0001>

<llo_original>
// kernel: synthetic_model.1
$region0: #{synthetic_model.1}
  #allocation0 [shape = 'u32[]', space=smem, size = 0x4, offset = 0x4, fixed_abs, tag = 'smem constant byte address 0x4 - core index']
  #allocation1 [shape = 'u32[144,128]{1,0:T(1,128)}', space=vmem, size = 0x12000, scoped, tag = 'internal scratch']
  %s0 = inlined_call_operand.vmem [shape: f32[2,1024], index: 0, kind: input, shape index: {}]
  %s1 = inlined_call_operand.hbm [shape: bf16[1024,128], index: 1, kind: input, shape index: {}]
  %s2 = inlined_call_operand.vmem [shape: f32[1,128], index: 2, kind: input, shape index: {}]
  %s3 = inlined_call_operand.hbm [shape: f32[2,128], index: 3, kind: output, shape index: {}]
  %s4 = sld [smem:[#allocation0]]
  $region26: #{synthetic_model.1} parent=0
    _
  %s6 = ssub.s32 1, %s4
  %s7 = scalar_select 0, %s6, %s4
  $region1: #{synthetic_model.1} parent=0
    #allocation2 [shape = 'u8[262144]{0}', space=vmem, size = 0x40000, scoped, tag = 'input window, operand 1, single buffered']
    #allocation3 [shape = 's32[1]{0}', space=sflag, size = 0x4, scoped, tag = 'scoped memory for synthetic_model.1']
    #allocation4 [shape = 's32[1]{0}', space=sflag, size = 0x4, scoped, tag = 'scoped memory for synthetic_model.1']
    #allocation5 [shape = 'u8[1024]{0}', space=vmem, size = 0x400, scoped, tag = 'output window, operand 0, single buffered']
    %8 = vsyncpa [#allocation3], 0
    %9 = vsyncpa [#allocation4], 0
    // Predicated region
    $region2: #{synthetic_model.1} parent=1 // pred_check
      _
    $region3: #{synthetic_model.1} parent=1 // pred_check_branch
      %11 = sbr.rel (0) target = $region5
    $region4: #{synthetic_model.1} parent=1 // pred_region
      _
    $region5: #{synthetic_model.1} parent=1 // pred_fallthru
      _
    // Predicated region
    $region6: #{synthetic_model.1} parent=1 // pred_check
      _
    $region7: #{synthetic_model.1} parent=1 // pred_check_branch
      %13 = sbr.rel (0) target = $region9
    $region8: #{synthetic_model.1} parent=1 // pred_region
      %s15 = ssub.s32 8192, 8192
      %16 = vsyncadd [#allocation3], %s15
      %s17 = sshll.u32 [#allocation2], 4
      %s18 = int_to_ptr.vmem [resolvable:$true] %s17
      %23 = dma.hbm_to_vmem [thread:$0]  %s1, 8192, %s18, [#allocation3], 64, 64, 4
    $region9: #{synthetic_model.1} parent=1 // pred_fallthru
      _
    // Predicated region
    $region10: #{synthetic_model.1} parent=1 // pred_check
      _
    $region11: #{synthetic_model.1} parent=1 // pred_check_branch
      %25 = sbr.rel (0) target = $region13
    $region12: #{synthetic_model.1} parent=1 // pred_region
      _
    $region13: #{synthetic_model.1} parent=1 // pred_fallthru
      _
    // Predicated region
    $region14: #{synthetic_model.1} parent=1 // pred_check
      _
    $region15: #{synthetic_model.1} parent=1 // pred_check_branch
      %27 = sbr.rel (0) target = $region17
    $region16: #{synthetic_model.1} parent=1 // pred_region
      %28 = dma.done [#allocation3], 8192
    $region17: #{synthetic_model.1} parent=1 // pred_fallthru
      _
    %v30 = vld [vmem:[%s0] sm:$0xff]
    %v31 = vld [vmem:[%s0 + $0x8] sm:$0xff]
    %v34 = vcombine.high %v30, %v30
    %v36 = vunpack.c.l.s4 1983009808
    %v37 = vunpack.c.0.s8 %v36
    %v38 = vlaneseq
    %v39 = vshrl.u32 %v38, 7
    %v40 = vsub.s32 %v37, %v39
    %v41 = vrot.slane %v30, %v40
    %v43 = vunpack.c.l.s4 1983009808
    %v44 = vunpack.c.0.s8 %v43
    %v45 = vlaneseq
    %v46 = vshrl.u32 %v45, 7
    %v47 = vsub.s32 %v44, %v46
    %v48 = vrot.slane %v34, %v47
    %v49 = vcombine.high %v41, %v41
    %v50 = vcombine.high %v48, %v48
    %v51 = vcombine.high %v31, %v31
    %v53 = vunpack.c.l.s4 1983009808
    %v54 = vunpack.c.0.s8 %v53
    %v55 = vlaneseq
    %v56 = vshrl.u32 %v55, 7
    %v57 = vsub.s32 %v54, %v56
    %v58 = vrot.slane %v31, %v57
    %v60 = vunpack.c.l.s4 1983009808
    %v61 = vunpack.c.0.s8 %v60
    %v62 = vlaneseq
    %v63 = vshrl.u32 %v62, 7
    %v64 = vsub.s32 %v61, %v63
    %v65 = vrot.slane %v51, %v64
    %v66 = vcombine.high %v58, %v58
    %v67 = vcombine.high %v65, %v65
    %v76 = vpack.c.bf16 %v41, %v41
    %v77 = vpack.c.bf16 %v49, %v49
    %v78 = vpack.c.bf16 %v48, %v48
    %v79 = vpack.c.bf16 %v50, %v50
    %v80 = vpack.c.bf16 %v58, %v58
    %v81 = vpack.c.bf16 %v66, %v66
    %v82 = vpack.c.bf16 %v65, %v65
    %v83 = vpack.c.bf16 %v67, %v67
    %v84 = vld [vmem:[#allocation2] sm:$0xf]
    %v85 = vld [vmem:[#allocation2 + $0x4] sm:$0xf]
    %v86 = vld [vmem:[#allocation2 + $0x8] sm:$0xf]
    %v87 = vld [vmem:[#allocation2 + $0xc] sm:$0xf]
    %v88 = vld [vmem:[#allocation2 + $0x10] sm:$0xf]
    %v89 = vld [vmem:[#allocation2 + $0x14] sm:$0xf]
    %v90 = vld [vmem:[#allocation2 + $0x18] sm:$0xf]
    %v91 = vld [vmem:[#allocation2 + $0x1c] sm:$0xf]
    %v92 = vld [vmem:[#allocation2 + $0x20] sm:$0xf]
    %v93 = vld [vmem:[#allocation2 + $0x24] sm:$0xf]
    %v94 = vld [vmem:[#allocation2 + $0x28] sm:$0xf]
    %v95 = vld [vmem:[#allocation2 + $0x2c] sm:$0xf]
    %v96 = vld [vmem:[#allocation2 + $0x30] sm:$0xf]
    %v97 = vld [vmem:[#allocation2 + $0x34] sm:$0xf]
    %v98 = vld [vmem:[#allocation2 + $0x38] sm:$0xf]
    %v99 = vld [vmem:[#allocation2 + $0x3c] sm:$0xf]
    %v100 = vld [vmem:[#allocation2 + $0x40] sm:$0xf]
    %v101 = vld [vmem:[#allocation2 + $0x44] sm:$0xf]
    %v102 = vld [vmem:[#allocation2 + $0x48] sm:$0xf]
    %v103 = vld [vmem:[#allocation2 + $0x4c] sm:$0xf]
    %v104 = vld [vmem:[#allocation2 + $0x50] sm:$0xf]
    %v105 = vld [vmem:[#allocation2 + $0x54] sm:$0xf]
    %v106 = vld [vmem:[#allocation2 + $0x58] sm:$0xf]
    %v107 = vld [vmem:[#allocation2 + $0x5c] sm:$0xf]
    %v108 = vld [vmem:[#allocation2 + $0x60] sm:$0xf]
    %v109 = vld [vmem:[#allocation2 + $0x64] sm:$0xf]
    %v110 = vld [vmem:[#allocation2 + $0x68] sm:$0xf]
    %v111 = vld [vmem:[#allocation2 + $0x6c] sm:$0xf]
    %v112 = vld [vmem:[#allocation2 + $0x70] sm:$0xf]
    %v113 = vld [vmem:[#allocation2 + $0x74] sm:$0xf]
    %v114 = vld [vmem:[#allocation2 + $0x78] sm:$0xf]
    %v115 = vld [vmem:[#allocation2 + $0x7c] sm:$0xf]
    %v116 = vld [vmem:[#allocation2 + $0x80] sm:$0xf]
    %v117 = vld [vmem:[#allocation2 + $0x84] sm:$0xf]
    %v118 = vld [vmem:[#allocation2 + $0x88] sm:$0xf]
    %v119 = vld [vmem:[#allocation2 + $0x8c] sm:$0xf]
    %v120 = vld [vmem:[#allocation2 + $0x90] sm:$0xf]
    %v121 = vld [vmem:[#allocation2 + $0x94] sm:$0xf]
    %v122 = vld [vmem:[#allocation2 + $0x98] sm:$0xf]
    %v123 = vld [vmem:[#allocation2 + $0x9c] sm:$0xf]
    %v124 = vld [vmem:[#allocation2 + $0xa0] sm:$0xf]
    %v125 = vld [vmem:[#allocation2 + $0xa4] sm:$0xf]
    %v126 = vld [vmem:[#allocation2 + $0xa8] sm:$0xf]
    %v127 = vld [vmem:[#allocation2 + $0xac] sm:$0xf]
    %v128 = vld [vmem:[#allocation2 + $0xb0] sm:$0xf]
    %v129 = vld [vmem:[#allocation2 + $0xb4] sm:$0xf]
    %v130 = vld [vmem:[#allocation2 + $0xb8] sm:$0xf]
    %v131 = vld [vmem:[#allocation2 + $0xbc] sm:$0xf]
    %v132 = vld [vmem:[#allocation2 + $0xc0] sm:$0xf]
    %v133 = vld [vmem:[#allocation2 + $0xc4] sm:$0xf]
    %v134 = vld [vmem:[#allocation2 + $0xc8] sm:$0xf]
    %v135 = vld [vmem:[#allocation2 + $0xcc] sm:$0xf]
    %v136 = vld [vmem:[#allocation2 + $0xd0] sm:$0xf]
    %v137 = vld [vmem:[#allocation2 + $0xd4] sm:$0xf]
    %v138 = vld [vmem:[#allocation2 + $0xd8] sm:$0xf]
    %v139 = vld [vmem:[#allocation2 + $0xdc] sm:$0xf]
    %v140 = vld [vmem:[#allocation2 + $0xe0] sm:$0xf]
    %v141 = vld [vmem:[#allocation2 + $0xe4] sm:$0xf]
    %v142 = vld [vmem:[#allocation2 + $0xe8] sm:$0xf]
    %v143 = vld [vmem:[#allocation2 + $0xec] sm:$0xf]
    %v144 = vld [vmem:[#allocation2 + $0xf0] sm:$0xf]
    %v145 = vld [vmem:[#allocation2 + $0xf4] sm:$0xf]
    %v146 = vld [vmem:[#allocation2 + $0xf8] sm:$0xf]
    %v147 = vld [vmem:[#allocation2 + $0xfc] sm:$0xf]
    %v148 = vld [vmem:[#allocation2 + $0x100] sm:$0xf]
    %v149 = vld [vmem:[#allocation2 + $0x104] sm:$0xf]
    %v150 = vld [vmem:[#allocation2 + $0x108] sm:$0xf]
    %v151 = vld [vmem:[#allocation2 + $0x10c] sm:$0xf]
    %v152 = vld [vmem:[#allocation2 + $0x110] sm:$0xf]
    %v153 = vld [vmem:[#allocation2 + $0x114] sm:$0xf]
    %v154 = vld [vmem:[#allocation2 + $0x118] sm:$0xf]
    %v155 = vld [vmem:[#allocation2 + $0x11c] sm:$0xf]
    %v156 = vld [vmem:[#allocation2 + $0x120] sm:$0xf]
    %v157 = vld [vmem:[#allocation2 + $0x124] sm:$0xf]
    %v158 = vld [vmem:[#allocation2 + $0x128] sm:$0xf]
    %v159 = vld [vmem:[#allocation2 + $0x12c] sm:$0xf]
    %v160 = vld [vmem:[#allocation2 + $0x130] sm:$0xf]
    %v161 = vld [vmem:[#allocation2 + $0x134] sm:$0xf]
    %v162 = vld [vmem:[#allocation2 + $0x138] sm:$0xf]
    %v163 = vld [vmem:[#allocation2 + $0x13c] sm:$0xf]
    %v164 = vld [vmem:[#allocation2 + $0x140] sm:$0xf]
    %v165 = vld [vmem:[#allocation2 + $0x144] sm:$0xf]
    %v166 = vld [vmem:[#allocation2 + $0x148] sm:$0xf]
    %v167 = vld [vmem:[#allocation2 + $0x14c] sm:$0xf]
    %v168 = vld [vmem:[#allocation2 + $0x150] sm:$0xf]
    %v169 = vld [vmem:[#allocation2 + $0x154] sm:$0xf]
    %v170 = vld [vmem:[#allocation2 + $0x158] sm:$0xf]
    %v171 = vld [vmem:[#allocation2 + $0x15c] sm:$0xf]
    %v172 = vld [vmem:[#allocation2 + $0x160] sm:$0xf]
    %v173 = vld [vmem:[#allocation2 + $0x164] sm:$0xf]
    %v174 = vld [vmem:[#allocation2 + $0x168] sm:$0xf]
    %v175 = vld [vmem:[#allocation2 + $0x16c] sm:$0xf]
    %v176 = vld [vmem:[#allocation2 + $0x170] sm:$0xf]
    %v177 = vld [vmem:[#allocation2 + $0x174] sm:$0xf]
    %v178 = vld [vmem:[#allocation2 + $0x178] sm:$0xf]
    %v179 = vld [vmem:[#allocation2 + $0x17c] sm:$0xf]
    %v180 = vld [vmem:[#allocation2 + $0x180] sm:$0xf]
    %v181 = vld [vmem:[#allocation2 + $0x184] sm:$0xf]
    %v182 = vld [vmem:[#allocation2 + $0x188] sm:$0xf]
    %v183 = vld [vmem:[#allocation2 + $0x18c] sm:$0xf]
    %v184 = vld [vmem:[#allocation2 + $0x190] sm:$0xf]
    %v185 = vld [vmem:[#allocation2 + $0x194] sm:$0xf]
    %v186 = vld [vmem:[#allocation2 + $0x198] sm:$0xf]
    %v187 = vld [vmem:[#allocation2 + $0x19c] sm:$0xf]
    %v188 = vld [vmem:[#allocation2 + $0x1a0] sm:$0xf]
    %v189 = vld [vmem:[#allocation2 + $0x1a4] sm:$0xf]
    %v190 = vld [vmem:[#allocation2 + $0x1a8] sm:$0xf]
    %v191 = vld [vmem:[#allocation2 + $0x1ac] sm:$0xf]
    %v192 = vld [vmem:[#allocation2 + $0x1b0] sm:$0xf]
    %v193 = vld [vmem:[#allocation2 + $0x1b4] sm:$0xf]
    %v194 = vld [vmem:[#allocation2 + $0x1b8] sm:$0xf]
    %v195 = vld [vmem:[#allocation2 + $0x1bc] sm:$0xf]
    %v196 = vld [vmem:[#allocation2 + $0x1c0] sm:$0xf]
    %v197 = vld [vmem:[#allocation2 + $0x1c4] sm:$0xf]
    %v198 = vld [vmem:[#allocation2 + $0x1c8] sm:$0xf]
    %v199 = vld [vmem:[#allocation2 + $0x1cc] sm:$0xf]
    %v200 = vld [vmem:[#allocation2 + $0x1d0] sm:$0xf]
    %v201 = vld [vmem:[#allocation2 + $0x1d4] sm:$0xf]
    %v202 = vld [vmem:[#allocation2 + $0x1d8] sm:$0xf]
    %v203 = vld [vmem:[#allocation2 + $0x1dc] sm:$0xf]
    %v204 = vld [vmem:[#allocation2 + $0x1e0] sm:$0xf]
    %v205 = vld [vmem:[#allocation2 + $0x1e4] sm:$0xf]
    %v206 = vld [vmem:[#allocation2 + $0x1e8] sm:$0xf]
    %v207 = vld [vmem:[#allocation2 + $0x1ec] sm:$0xf]
    %v208 = vld [vmem:[#allocation2 + $0x1f0] sm:$0xf]
    %v209 = vld [vmem:[#allocation2 + $0x1f4] sm:$0xf]
    %v210 = vld [vmem:[#allocation2 + $0x1f8] sm:$0xf]
    %v211 = vld [vmem:[#allocation2 + $0x1fc] sm:$0xf]
    %v212 = vld [vmem:[%s2] sm:$0x1]
    %v214 = vlaneseq
    %v215 = vshrl.u32 %v214, 7
    %v216 = vsub.s32 0, %v215
    %v217 = vrot.slane %v212, %v216
    %v347 = vunpack.c.l.b16 %v84
    %v348 = vunpack.c.l.b16 %v85
    %v349 = vunpack.c.l.b16 %v86
    %v350 = vunpack.c.l.b16 %v87
    %v351 = vunpack.c.l.b16 %v88
    %v352 = vunpack.c.l.b16 %v89
    %v353 = vunpack.c.l.b16 %v90
    %v354 = vunpack.c.l.b16 %v91
    %v355 = vunpack.c.l.b16 %v92
    %v356 = vunpack.c.l.b16 %v93
    %v357 = vunpack.c.l.b16 %v94
    %v358 = vunpack.c.l.b16 %v95
    %v359 = vunpack.c.l.b16 %v96
    %v360 = vunpack.c.l.b16 %v97
    %v361 = vunpack.c.l.b16 %v98
    %v362 = vunpack.c.l.b16 %v99
    %v363 = vunpack.c.l.b16 %v100
    %v364 = vunpack.c.l.b16 %v101
    %v365 = vunpack.c.l.b16 %v102
    %v366 = vunpack.c.l.b16 %v103
    %v367 = vunpack.c.l.b16 %v104
    %v368 = vunpack.c.l.b16 %v105
    %v369 = vunpack.c.l.b16 %v106
    %v370 = vunpack.c.l.b16 %v107
    %v371 = vunpack.c.l.b16 %v108
    %v372 = vunpack.c.l.b16 %v109
    %v373 = vunpack.c.l.b16 %v110
    %v374 = vunpack.c.l.b16 %v111
    %v375 = vunpack.c.l.b16 %v112
    %v376 = vunpack.c.l.b16 %v113
    %v377 = vunpack.c.l.b16 %v114
    %v378 = vunpack.c.l.b16 %v115
    %v379 = vunpack.c.l.b16 %v116
    %v380 = vunpack.c.l.b16 %v117
    %v381 = vunpack.c.l.b16 %v118
    %v382 = vunpack.c.l.b16 %v119
    %v383 = vunpack.c.l.b16 %v120
    %v384 = vunpack.c.l.b16 %v121
    %v385 = vunpack.c.l.b16 %v122
    %v386 = vunpack.c.l.b16 %v123
    %v387 = vunpack.c.l.b16 %v124
    %v388 = vunpack.c.l.b16 %v125
    %v389 = vunpack.c.l.b16 %v126
    %v390 = vunpack.c.l.b16 %v127
    %v391 = vunpack.c.l.b16 %v128
    %v392 = vunpack.c.l.b16 %v129
    %v393 = vunpack.c.l.b16 %v130
    %v394 = vunpack.c.l.b16 %v131
    %v395 = vunpack.c.l.b16 %v132
    %v396 = vunpack.c.l.b16 %v133
    %v397 = vunpack.c.l.b16 %v134
    %v398 = vunpack.c.l.b16 %v135
    %v399 = vunpack.c.l.b16 %v136
    %v400 = vunpack.c.l.b16 %v137
    %v401 = vunpack.c.l.b16 %v138
    %v402 = vunpack.c.l.b16 %v139
    %v403 = vunpack.c.l.b16 %v140
    %v404 = vunpack.c.l.b16 %v141
    %v405 = vunpack.c.l.b16 %v142
    %v406 = vunpack.c.l.b16 %v143
    %v407 = vunpack.c.l.b16 %v144
    %v408 = vunpack.c.l.b16 %v145
    %v409 = vunpack.c.l.b16 %v146
    %v410 = vunpack.c.l.b16 %v147
    %v411 = vunpack.c.l.b16 %v148
    %v412 = vunpack.c.l.b16 %v149
    %v413 = vunpack.c.l.b16 %v150
    %v414 = vunpack.c.l.b16 %v151
    %v415 = vunpack.c.l.b16 %v152
    %v416 = vunpack.c.l.b16 %v153
    %v417 = vunpack.c.l.b16 %v154
    %v418 = vunpack.c.l.b16 %v155
    %v419 = vunpack.c.l.b16 %v156
    %v420 = vunpack.c.l.b16 %v157
    %v421 = vunpack.c.l.b16 %v158
    %v422 = vunpack.c.l.b16 %v159
    %v423 = vunpack.c.l.b16 %v160
    %v424 = vunpack.c.l.b16 %v161
    %v425 = vunpack.c.l.b16 %v162
    %v426 = vunpack.c.l.b16 %v163
    %v427 = vunpack.c.l.b16 %v164
    %v428 = vunpack.c.l.b16 %v165
    %v429 = vunpack.c.l.b16 %v166
    %v430 = vunpack.c.l.b16 %v167
    %v431 = vunpack.c.l.b16 %v168
    %v432 = vunpack.c.l.b16 %v169
    %v433 = vunpack.c.l.b16 %v170
    %v434 = vunpack.c.l.b16 %v171
    %v435 = vunpack.c.l.b16 %v172
    %v436 = vunpack.c.l.b16 %v173
    %v437 = vunpack.c.l.b16 %v174
    %v438 = vunpack.c.l.b16 %v175
    %v439 = vunpack.c.l.b16 %v176
    %v440 = vunpack.c.l.b16 %v177
    %v441 = vunpack.c.l.b16 %v178
    %v442 = vunpack.c.l.b16 %v179
    %v443 = vunpack.c.l.b16 %v180
    %v444 = vunpack.c.l.b16 %v181
    %v445 = vunpack.c.l.b16 %v182
    %v446 = vunpack.c.l.b16 %v183
    %v447 = vunpack.c.l.b16 %v184
    %v448 = vunpack.c.l.b16 %v185
    %v449 = vunpack.c.l.b16 %v186
    %v450 = vunpack.c.l.b16 %v187
    %v451 = vunpack.c.l.b16 %v188
    %v452 = vunpack.c.l.b16 %v189
    %v453 = vunpack.c.l.b16 %v190
    %v454 = vunpack.c.l.b16 %v191
    %v455 = vunpack.c.l.b16 %v192
    %v456 = vunpack.c.l.b16 %v193
    %v457 = vunpack.c.l.b16 %v194
    %v458 = vunpack.c.l.b16 %v195
    %v459 = vunpack.c.l.b16 %v196
    %v460 = vunpack.c.l.b16 %v197
    %v461 = vunpack.c.l.b16 %v198
    %v462 = vunpack.c.l.b16 %v199
    %v463 = vunpack.c.l.b16 %v200
    %v464 = vunpack.c.l.b16 %v201
    %v465 = vunpack.c.l.b16 %v202
    %v466 = vunpack.c.l.b16 %v203
    %v467 = vunpack.c.l.b16 %v204
    %v468 = vunpack.c.l.b16 %v205
    %v469 = vunpack.c.l.b16 %v206
    %v470 = vunpack.c.l.b16 %v207
    %v471 = vunpack.c.l.b16 %v208
    %v472 = vunpack.c.l.b16 %v209
    %v473 = vunpack.c.l.b16 %v210
    %v474 = vunpack.c.l.b16 %v211
    %v475 = vpack.c.b16 %v348, %v347
    %v476 = vpack.c.b16 %v350, %v349
    %v477 = vpack.c.b16 %v352, %v351
    %v478 = vpack.c.b16 %v354, %v353
    %v479 = vpack.c.b16 %v356, %v355
    %v480 = vpack.c.b16 %v358, %v357
    %v481 = vpack.c.b16 %v360, %v359
    %v482 = vpack.c.b16 %v362, %v361
    %v483 = vpack.c.b16 %v364, %v363
    %v484 = vpack.c.b16 %v366, %v365
    %v485 = vpack.c.b16 %v368, %v367
    %v486 = vpack.c.b16 %v370, %v369
    %v487 = vpack.c.b16 %v372, %v371
    %v488 = vpack.c.b16 %v374, %v373
    %v489 = vpack.c.b16 %v376, %v375
    %v490 = vpack.c.b16 %v378, %v377
    %v491 = vpack.c.b16 %v380, %v379
    %v492 = vpack.c.b16 %v382, %v381
    %v493 = vpack.c.b16 %v384, %v383
    %v494 = vpack.c.b16 %v386, %v385
    %v495 = vpack.c.b16 %v388, %v387
    %v496 = vpack.c.b16 %v390, %v389
    %v497 = vpack.c.b16 %v392, %v391
    %v498 = vpack.c.b16 %v394, %v393
    %v499 = vpack.c.b16 %v396, %v395
    %v500 = vpack.c.b16 %v398, %v397
    %v501 = vpack.c.b16 %v400, %v399
    %v502 = vpack.c.b16 %v402, %v401
    %v503 = vpack.c.b16 %v404, %v403
    %v504 = vpack.c.b16 %v406, %v405
    %v505 = vpack.c.b16 %v408, %v407
    %v506 = vpack.c.b16 %v410, %v409
    %v507 = vpack.c.b16 %v412, %v411
    %v508 = vpack.c.b16 %v414, %v413
    %v509 = vpack.c.b16 %v416, %v415
    %v510 = vpack.c.b16 %v418, %v417
    %v511 = vpack.c.b16 %v420, %v419
    %v512 = vpack.c.b16 %v422, %v421
    %v513 = vpack.c.b16 %v424, %v423
    %v514 = vpack.c.b16 %v426, %v425
    %v515 = vpack.c.b16 %v428, %v427
    %v516 = vpack.c.b16 %v430, %v429
    %v517 = vpack.c.b16 %v432, %v431
    %v518 = vpack.c.b16 %v434, %v433
    %v519 = vpack.c.b16 %v436, %v435
    %v520 = vpack.c.b16 %v438, %v437
    %v521 = vpack.c.b16 %v440, %v439
    %v522 = vpack.c.b16 %v442, %v441
    %v523 = vpack.c.b16 %v444, %v443
    %v524 = vpack.c.b16 %v446, %v445
    %v525 = vpack.c.b16 %v448, %v447
    %v526 = vpack.c.b16 %v450, %v449
    %v527 = vpack.c.b16 %v452, %v451
    %v528 = vpack.c.b16 %v454, %v453
    %v529 = vpack.c.b16 %v456, %v455
    %v530 = vpack.c.b16 %v458, %v457
    %v531 = vpack.c.b16 %v460, %v459
    %v532 = vpack.c.b16 %v462, %v461
    %v533 = vpack.c.b16 %v464, %v463
    %v534 = vpack.c.b16 %v466, %v465
    %v535 = vpack.c.b16 %v468, %v467
    %v536 = vpack.c.b16 %v470, %v469
    %v537 = vpack.c.b16 %v472, %v471
    %v538 = vpack.c.b16 %v474, %v473
    %603 = vmatprep.subr.bf16.mxu0 0
    %604 = vmatpush1.bf16.msra.mxu0 %v475
    %605 = vmatprep.subr.bf16.mxu0 0
    %606 = vmatpush1.bf16.msra.mxu0 %v476
    %607 = vmatprep.subr.bf16.mxu0 0
    %608 = vmatpush1.bf16.msra.mxu0 %v477
    %609 = vmatprep.subr.bf16.mxu0 0
    %610 = vmatpush1.bf16.msra.mxu0 %v478
    %611 = vmatprep.subr.bf16.mxu0 0
    %612 = vmatpush1.bf16.msra.mxu0 %v479
    %613 = vmatprep.subr.bf16.mxu0 0
    %614 = vmatpush1.bf16.msra.mxu0 %v480
    %615 = vmatprep.subr.bf16.mxu0 0
    %616 = vmatpush1.bf16.msra.mxu0 %v481
    %617 = vmatprep.subr.bf16.mxu0 0
    %618 = vmatpush1.bf16.msra.mxu0 %v482
    %619 = vmatprep.subr.bf16.mxu0 0
    %620 = vmatpush1.bf16.msra.mxu0 %v483
    %621 = vmatprep.subr.bf16.mxu0 0
    %622 = vmatpush1.bf16.msra.mxu0 %v484
    %623 = vmatprep.subr.bf16.mxu0 0
    %624 = vmatpush1.bf16.msra.mxu0 %v485
    %625 = vmatprep.subr.bf16.mxu0 0
    %626 = vmatpush1.bf16.msra.mxu0 %v486
    %627 = vmatprep.subr.bf16.mxu0 0
    %628 = vmatpush1.bf16.msra.mxu0 %v487
    %629 = vmatprep.subr.bf16.mxu0 0
    %630 = vmatpush1.bf16.msra.mxu0 %v488
    %631 = vmatprep.subr.bf16.mxu0 0
    %632 = vmatpush1.bf16.msra.mxu0 %v489
    %633 = vmatprep.subr.bf16.mxu0 0
    %634 = vmatpush1.bf16.msra.mxu0 %v490
    %635 = vmatprep.mubr.bf16.mxu0 %v77
    %636 = vmatmul.mubr.bf16.gmra.mrb[0].mxu0 %v76
    %v637 = vpop.f32.mrb[0].mxu0
    %v638 = vadd.f32 %v217, %v637
    %v639 = vpop.f32.mrb[0].mxu0
    %v640 = vpop.f32.mrb[0].mxu0
    %v641 = vpop.f32.mrb[0].mxu0
    %642 = vdwg.mxu0
    %643 = vmatprep.subr.bf16.mxu0 0
    %644 = vmatpush1.bf16.msra.mxu0 %v491
    %645 = vmatprep.subr.bf16.mxu0 0
    %646 = vmatpush1.bf16.msra.mxu0 %v492
    %647 = vmatprep.subr.bf16.mxu0 0
    %648 = vmatpush1.bf16.msra.mxu0 %v493
    %649 = vmatprep.subr.bf16.mxu0 0
    %650 = vmatpush1.bf16.msra.mxu0 %v494
    %651 = vmatprep.subr.bf16.mxu0 0
    %652 = vmatpush1.bf16.msra.mxu0 %v495
    %653 = vmatprep.subr.bf16.mxu0 0
    %654 = vmatpush1.bf16.msra.mxu0 %v496
    %655 = vmatprep.subr.bf16.mxu0 0
    %656 = vmatpush1.bf16.msra.mxu0 %v497
    %657 = vmatprep.subr.bf16.mxu0 0
    %658 = vmatpush1.bf16.msra.mxu0 %v498
    %659 = vmatprep.subr.bf16.mxu0 0
    %660 = vmatpush1.bf16.msra.mxu0 %v499
    %661 = vmatprep.subr.bf16.mxu0 0
    %662 = vmatpush1.bf16.msra.mxu0 %v500
    %663 = vmatprep.subr.bf16.mxu0 0
    %664 = vmatpush1.bf16.msra.mxu0 %v501
    %665 = vmatprep.subr.bf16.mxu0 0
    %666 = vmatpush1.bf16.msra.mxu0 %v502
    %667 = vmatprep.subr.bf16.mxu0 0
    %668 = vmatpush1.bf16.msra.mxu0 %v503
    %669 = vmatprep.subr.bf16.mxu0 0
    %670 = vmatpush1.bf16.msra.mxu0 %v504
    %671 = vmatprep.subr.bf16.mxu0 0
    %672 = vmatpush1.bf16.msra.mxu0 %v505
    %673 = vmatprep.subr.bf16.mxu0 0
    %674 = vmatpush1.bf16.msra.mxu0 %v506
    %675 = vmatprep.mubr.bf16.mxu0 %v79
    %676 = vmatmul.mubr.bf16.gmra.mrb[0].mxu0 %v78
    %v677 = vpop.f32.mrb[0].mxu0
    %v678 = vadd.f32 %v638, %v677
    %v679 = vpop.f32.mrb[0].mxu0
    %v680 = vpop.f32.mrb[0].mxu0
    %v681 = vpop.f32.mrb[0].mxu0
    %682 = vdwg.mxu0
    %683 = vmatprep.subr.bf16.mxu0 0
    %684 = vmatpush1.bf16.msra.mxu0 %v507
    %685 = vmatprep.subr.bf16.mxu0 0
    %686 = vmatpush1.bf16.msra.mxu0 %v508
    %687 = vmatprep.subr.bf16.mxu0 0
    %688 = vmatpush1.bf16.msra.mxu0 %v509
    %689 = vmatprep.subr.bf16.mxu0 0
    %690 = vmatpush1.bf16.msra.mxu0 %v510
    %691 = vmatprep.subr.bf16.mxu0 0
    %692 = vmatpush1.bf16.msra.mxu0 %v511
    %693 = vmatprep.subr.bf16.mxu0 0
    %694 = vmatpush1.bf16.msra.mxu0 %v512
    %695 = vmatprep.subr.bf16.mxu0 0
    %696 = vmatpush1.bf16.msra.mxu0 %v513
    %697 = vmatprep.subr.bf16.mxu0 0
    %698 = vmatpush1.bf16.msra.mxu0 %v514
    %699 = vmatprep.subr.bf16.mxu0 0
    %700 = vmatpush1.bf16.msra.mxu0 %v515
    %701 = vmatprep.subr.bf16.mxu0 0
    %702 = vmatpush1.bf16.msra.mxu0 %v516
    %703 = vmatprep.subr.bf16.mxu0 0
    %704 = vmatpush1.bf16.msra.mxu0 %v517
    %705 = vmatprep.subr.bf16.mxu0 0
    %706 = vmatpush1.bf16.msra.mxu0 %v518
    %707 = vmatprep.subr.bf16.mxu0 0
    %708 = vmatpush1.bf16.msra.mxu0 %v519
    %709 = vmatprep.subr.bf16.mxu0 0
    %710 = vmatpush1.bf16.msra.mxu0 %v520
    %711 = vmatprep.subr.bf16.mxu0 0
    %712 = vmatpush1.bf16.msra.mxu0 %v521
    %713 = vmatprep.subr.bf16.mxu0 0
    %714 = vmatpush1.bf16.msra.mxu0 %v522
    %715 = vmatprep.mubr.bf16.mxu0 %v81
    %716 = vmatmul.mubr.bf16.gmra.mrb[0].mxu0 %v80
    %v717 = vpop.f32.mrb[0].mxu0
    %v718 = vadd.f32 %v678, %v717
    %v719 = vpop.f32.mrb[0].mxu0
    %v720 = vpop.f32.mrb[0].mxu0
    %v721 = vpop.f32.mrb[0].mxu0
    %722 = vdwg.mxu0
    %723 = vmatprep.subr.bf16.mxu0 0
    %724 = vmatpush1.bf16.msra.mxu0 %v523
    %725 = vmatprep.subr.bf16.mxu0 0
    %726 = vmatpush1.bf16.msra.mxu0 %v524
    %727 = vmatprep.subr.bf16.mxu0 0
    %728 = vmatpush1.bf16.msra.mxu0 %v525
    %729 = vmatprep.subr.bf16.mxu0 0
    %730 = vmatpush1.bf16.msra.mxu0 %v526
    %731 = vmatprep.subr.bf16.mxu0 0
    %732 = vmatpush1.bf16.msra.mxu0 %v527
    %733 = vmatprep.subr.bf16.mxu0 0
    %734 = vmatpush1.bf16.msra.mxu0 %v528
    %735 = vmatprep.subr.bf16.mxu0 0
    %736 = vmatpush1.bf16.msra.mxu0 %v529
    %737 = vmatprep.subr.bf16.mxu0 0
    %738 = vmatpush1.bf16.msra.mxu0 %v530
    %739 = vmatprep.subr.bf16.mxu0 0
    %740 = vmatpush1.bf16.msra.mxu0 %v531
    %741 = vmatprep.subr.bf16.mxu0 0
    %742 = vmatpush1.bf16.msra.mxu0 %v532
    %743 = vmatprep.subr.bf16.mxu0 0
    %744 = vmatpush1.bf16.msra.mxu0 %v533
    %745 = vmatprep.subr.bf16.mxu0 0
    %746 = vmatpush1.bf16.msra.mxu0 %v534
    %747 = vmatprep.subr.bf16.mxu0 0
    %748 = vmatpush1.bf16.msra.mxu0 %v535
    %749 = vmatprep.subr.bf16.mxu0 0
    %750 = vmatpush1.bf16.msra.mxu0 %v536
    %751 = vmatprep.subr.bf16.mxu0 0
    %752 = vmatpush1.bf16.msra.mxu0 %v537
    %753 = vmatprep.subr.bf16.mxu0 0
    %754 = vmatpush1.bf16.msra.mxu0 %v538
    %755 = vmatprep.mubr.bf16.mxu0 %v83
    %756 = vmatmul.mubr.bf16.gmra.mrb[0].mxu0 %v82
    %v757 = vpop.f32.mrb[0].mxu0
    %v758 = vadd.f32 %v718, %v757
    %v759 = vpop.f32.mrb[0].mxu0
    %v760 = vpop.f32.mrb[0].mxu0
    %v761 = vpop.f32.mrb[0].mxu0
    %762 = vdwg.mxu0
    %763 = vst [vmem:[#allocation5] sm:$0x3] %v758
    // Predicated region
    $region18: #{synthetic_model.1} parent=1 // pred_check
      _
    $region19: #{synthetic_model.1} parent=1 // pred_check_branch
      %765 = sbr.rel (0) target = $region21
    $region20: #{synthetic_model.1} parent=1 // pred_region
      %s767 = ssub.s32 32, 32
      %768 = vsyncadd [#allocation4], %s767
      %s770 = sshll.u32 [#allocation5], 4
      %s771 = int_to_ptr.vmem [resolvable:$true] %s770
      %773 = dma.vmem_to_hbm [thread:$0]  %s771, 32, %s3, [#allocation4]
    $region21: #{synthetic_model.1} parent=1 // pred_fallthru
      _
    // Predicated region
    $region22: #{synthetic_model.1} parent=1 // pred_check
      _
    $region23: #{synthetic_model.1} parent=1 // pred_check_branch
      %775 = sbr.rel (0) target = $region25
    $region24: #{synthetic_model.1} parent=1 // pred_region
      %776 = dma.done [#allocation4], 32
    $region25: #{synthetic_model.1} parent=1 // pred_fallthru
      _
    %777 = vsyncpa [#allocation3], 1
    %778 = vsyncpa [#allocation4], 1

</llo_original>
